<compile_context>
chip_gen: v7x
topology: tpu7x:2x2x1
jax: 0.10.0
libtpu: 0.0.40
codegen_flags: <defaults>
</compile_context>

<pallas_src>
import functools

import jax
import jax.numpy as jnp
from jax import lax
from jax.experimental import pallas as pl
from jax.experimental.pallas import tpu as pltpu

_EPS = 1e-6  # matches torch F.pairwise_distance default eps


def _round_up(x, m):
    return ((x + m - 1) // m) * m


def _contrastive_kernel(x1_ref, x2_ref, lab_ref, out_ref, sq_ref, *,
                        n_rows, tile_rows, row_steps, margin, need_row_mask):
    c = pl.program_id(0)          # core-partial index
    i = pl.program_id(1)          # batch tile within this partial
    k = pl.program_id(2)          # D chunk
    nk = pl.num_programs(2)

    @pl.when((i == 0) & (k == 0))
    def _init_out():
        out_ref[...] = jnp.zeros_like(out_ref)

    @pl.when(k == 0)
    def _init_sq():
        sq_ref[...] = jnp.zeros_like(sq_ref)

    # Load native dtype, upcast in VMEM (VPU op; keeps HBM traffic minimal).
    x1 = x1_ref[...].astype(jnp.float32)          # (TB, TD)
    x2 = x2_ref[...].astype(jnp.float32)          # (TB, TD)
    diff = x1 - x2 + _EPS
    sq_ref[...] += jnp.sum(diff * diff, axis=-1, keepdims=True)   # (TB, 1)

    @pl.when(k == nk - 1)
    def _finish_rows():
        lab = lab_ref[...].astype(jnp.float32)    # (TB, 1)
        sq = sq_ref[...]                          # (TB, 1) squared distance
        d = jnp.sqrt(sq)                          # sqrt only needed for the hinge
        hinge = jnp.maximum(margin - d, 0.0)
        per_row = (1.0 - lab) * sq + lab * (hinge * hinge)
        if need_row_mask:
            # Mask rows of partial / duplicated (clamped) tail tiles using the
            # *logical* (unclamped) tile index.
            row_block = c * row_steps + i
            row_ids = row_block * tile_rows + lax.broadcasted_iota(
                jnp.int32, per_row.shape, 0)
            per_row = jnp.where(row_ids < n_rows, per_row, 0.0)
        partial = jnp.sum(per_row, axis=(0, 1), keepdims=True)    # (1, 1)
        out_ref[...] = out_ref[...] + partial.reshape(1, 1, 1)


def _chip_vmem_capacity_bytes():
    try:
        return int(pltpu.get_tpu_info().vmem_capacity_bytes)
    except Exception:
        return 64 * 1024 * 1024   # conservative fallback: v7x per-TC VMEM


def _choose_tiles(n_rows, d, itemsize, budget_bytes, target_rows=512):
    """Pick (tile_rows, tile_cols) so DMA blocks + f32 temporaries fit the budget."""
    lab_pad_bytes = 3 * 128 * 4   # padded (TB,1)->(TB,128) f32 label x2 buffers + sq scratch

    def per_row_bytes(td):
        # 2 inputs x 2 pipeline buffers in native dtype + ~3 f32 temporaries per element.
        return td * (4 * itemsize + 12) + lab_pad_bytes

    def rows_for(td):
        tb = budget_bytes // per_row_bytes(td)
        return max(8, (tb // 8) * 8)

    tile_cols = d
    tile_rows = rows_for(d)
    if tile_rows < min(target_rows, n_rows) and d > 1024:
        # Very wide embedding: chunk D (inner grid axis) instead of shrinking TB.
        cand = (budget_bytes // max(target_rows, 8) - lab_pad_bytes) // (4 * itemsize + 12)
        cand = (cand // 128) * 128
        while cand >= 128 and d % cand != 0:
            cand -= 128
        if cand >= 128:
            tile_cols = cand
            tile_rows = rows_for(cand)
    if tile_rows >= n_rows:
        tile_rows = n_rows
    return tile_rows, tile_cols


def contrastive_loss(output1, output2, label, margin=1.0,
                     tile_rows=None, tile_cols=None, num_partials=None):
    """output1, output2: (B, D); label: (B,). Returns scalar f32 loss."""
    B, D = output1.shape
    lab2d = label.reshape(B, 1)
    itemsize = jnp.dtype(output1.dtype).itemsize

    vmem_cap = _chip_vmem_capacity_bytes()
    # Generation-aware DMA budget: 40 MiB on 64-MiB v7x, 80 MiB on 128-MiB v5e/v6e.
    budget = (vmem_cap * 5) // 8

    auto_tb, auto_td = _choose_tiles(B, D, itemsize, budget)
    if tile_rows is None:
        tb = auto_tb
    else:
        tb = min(int(tile_rows), B)
        if tb < B:
            tb = max(8, (tb // 8) * 8)           # keep sublane-dim legality
    td = auto_td if tile_cols is None else int(tile_cols)
    if td != D and (D % td != 0 or td % 128 != 0):
        td = D                                    # fall back: no D chunking
    d_steps = D // td

    row_tiles = -(-B // tb)
    if num_partials is None:
        # Two per-core partials when there is enough work; on 1-TC chips the
        # size-2 "parallel" axis just runs serially (no measurable cost).
        num_partials = 2 if row_tiles >= 2 else 1
    num_partials = max(1, min(int(num_partials), row_tiles))
    row_steps = -(-row_tiles // num_partials)
    need_row_mask = (num_partials * row_steps * tb != B)

    kernel = functools.partial(
        _contrastive_kernel, n_rows=B, tile_rows=tb, row_steps=row_steps,
        margin=float(margin), need_row_mask=need_row_mask)

    # Explicit scoped-VMEM limit so big tiles compile on every generation.
    lab_rows_pad = _round_up(tb, 8)
    needed = (4 * tb * td * itemsize            # x1/x2 blocks, double-buffered
              + 3 * lab_rows_pad * 128 * 4      # padded label (x2 buffers) + sq scratch
              + 3 * tb * td * 4)                # f32 upcast temporaries
    vmem_limit = int(min(vmem_cap, max(needed + (16 << 20), 32 << 20)))

    cost = pl.CostEstimate(
        flops=4 * B * D,
        transcendentals=B,  # one sqrt per row
        bytes_accessed=(2 * B * D * itemsize
                        + B * jnp.dtype(lab2d.dtype).itemsize
                        + num_partials * 4),
    )

    # Row-tile index maps: clamp to the last valid tile so no DMA is issued for
    # a fully out-of-bounds block (its contribution is masked in-kernel).
    x_map = lambda c, i, k, rs=row_steps, nt=row_tiles: (
        jnp.minimum(c * rs + i, nt - 1), k)
    lab_map = lambda c, i, k, rs=row_steps, nt=row_tiles: (
        jnp.minimum(c * rs + i, nt - 1), 0)

    out = pl.pallas_call(
        kernel,
        out_shape=jax.ShapeDtypeStruct((num_partials, 1, 1), jnp.float32),
        grid=(num_partials, row_steps, d_steps),
        in_specs=[
            pl.BlockSpec((tb, td), x_map),
            pl.BlockSpec((tb, td), x_map),
            pl.BlockSpec((tb, 1), lab_map),
        ],
        # Per-core resident accumulator: same block across (i, k), one per c.
        out_specs=pl.BlockSpec((1, 1, 1), lambda c, i, k: (c, 0, 0)),
        scratch_shapes=[pltpu.VMEM((tb, 1), jnp.float32)],
        compiler_params=pltpu.CompilerParams(
            dimension_semantics=("parallel", "arbitrary", "arbitrary"),
            vmem_limit_bytes=vmem_limit,
        ),
        cost_estimate=cost,
    )(output1, output2, lab2d)

    return jnp.sum(out) / B


def _reference(output1, output2, label, margin=1.0):
    x1 = output1.astype(jnp.float32)
    x2 = output2.astype(jnp.float32)
    d = jnp.sqrt(jnp.sum((x1 - x2 + _EPS) ** 2, axis=-1))
    hinge = jnp.clip(margin - d, 0.0, None)
    return jnp.mean((1.0 - label) * d**2 + label * hinge**2)


if __name__ == "__main__":
    key = jax.random.PRNGKey(0)
    k1, k2, k3 = jax.random.split(key, 3)

    # 1) Small, single-tile case (auto tiling).
    B, D = 32, 128
    x1 = jax.random.normal(k1, (B, D), dtype=jnp.float32)
    x2 = jax.random.normal(k2, (B, D), dtype=jnp.float32)
    lab = jax.random.bernoulli(k3, 0.5, (B,)).astype(jnp.float32)
    loss = contrastive_loss(x1, x2, lab)
    jax.block_until_ready(loss)
    ref = _reference(x1, x2, lab)
    assert jnp.allclose(loss, ref, rtol=1e-5, atol=1e-5), (loss, ref)

    # 2) Ragged tail + forced small tile: multi-step accumulation, two
    #    core-partials, clamped tail tile, in-kernel row mask.
    B2 = 20
    x1b = jax.random.normal(k1, (B2, D), dtype=jnp.float32)
    x2b = jax.random.normal(k2, (B2, D), dtype=jnp.float32)
    labb = jax.random.bernoulli(k3, 0.5, (B2,)).astype(jnp.float32)
    loss2 = contrastive_loss(x1b, x2b, labb, tile_rows=8)
    jax.block_until_ready(loss2)
    ref2 = _reference(x1b, x2b, labb)
    assert jnp.allclose(loss2, ref2, rtol=1e-5, atol=1e-5), (loss2, ref2)

    # 3) Forced D chunking: inner grid axis over D with the (TB,1) scratch
    #    accumulator for the squared distance.
    D3 = 256
    x1c = jax.random.normal(k1, (B, D3), dtype=jnp.float32)
    x2c = jax.random.normal(k2, (B, D3), dtype=jnp.float32)
    loss3 = contrastive_loss(x1c, x2c, lab, tile_rows=8, tile_cols=128)
    jax.block_until_ready(loss3)
    ref3 = _reference(x1c, x2c, lab)
    assert jnp.allclose(loss3, ref3, rtol=1e-5, atol=1e-5), (loss3, ref3)

    # 4) bf16 inputs stay bf16 on the wire; the kernel upcasts in VMEM.
    loss4 = contrastive_loss(x1.astype(jnp.bfloat16), x2.astype(jnp.bfloat16), lab)
    jax.block_until_ready(loss4)
    ref4 = _reference(x1.astype(jnp.bfloat16), x2.astype(jnp.bfloat16), lab)
    assert jnp.allclose(loss4, ref4, rtol=1e-3, atol=1e-3), (loss4, ref4)

    print("KERNEL_OK")
</pallas_src>

<mosaic_0001>
module attributes {stable_mosaic.version = 11 : i64} {
  func.func @_contrastive_kernel(%arg0: i32, %arg1: i32, %arg2: i32, %arg3: memref<32x128xf32, #tpu.memory_space<vmem>>, %arg4: memref<32x128xf32, #tpu.memory_space<vmem>>, %arg5: memref<32x1xf32, #tpu.memory_space<vmem>>, %arg6: memref<1x1x1xf32, #tpu.memory_space<vmem>>, %arg7: memref<32x1xf32, #tpu.memory_space<vmem>>) attributes {dimension_semantics = [#tpu.dimension_semantics<parallel>, #tpu.dimension_semantics<arbitrary>, #tpu.dimension_semantics<arbitrary>], iteration_bounds = array<i64: 1, 1, 1>, scalar_prefetch = 0 : i64, scratch_operands = 1 : i64, tpu.core_type = #tpu.core_type<tc>, window_params = [{transform_indices = @transform_0, window_bounds = array<i64: 32, 128>}, {transform_indices = @transform_1, window_bounds = array<i64: 32, 128>}, {transform_indices = @transform_2, window_bounds = array<i64: 32, 1>}, {transform_indices = @transform_3, window_bounds = array<i64: 1, 1, 1>}]} {
    %c0_i32 = arith.constant 0 : i32
    %0 = arith.cmpi eq, %arg1, %c0_i32 : i32
    %c0_i32_0 = arith.constant 0 : i32
    %1 = arith.cmpi eq, %arg2, %c0_i32_0 : i32
    %2 = arith.andi %0, %1 : i1
    %3 = arith.extui %2 : i1 to i32
    %c0_i32_1 = arith.constant 0 : i32
    %4 = arith.cmpi ne, %3, %c0_i32_1 : i32
    scf.if %4 {
      %cst_14 = arith.constant 0.000000e+00 : f32
      %22 = vector.broadcast %cst_14 : f32 to vector<1x1x1xf32>
      %c0_15 = arith.constant 0 : index
      %c0_16 = arith.constant 0 : index
      %c0_17 = arith.constant 0 : index
      %23 = vector.load %arg6[%c0_15, %c0_16, %c0_17] : memref<1x1x1xf32, #tpu.memory_space<vmem>>, vector<1x1x1xf32>
      tpu.vector_store %arg6[%c0_15, %c0_16, %c0_17], %22 {strides = array<i32>} : memref<1x1x1xf32, #tpu.memory_space<vmem>>, vector<1x1x1xf32>,
    } else {
    }
    %c0_i32_2 = arith.constant 0 : i32
    %5 = arith.cmpi eq, %arg2, %c0_i32_2 : i32
    %6 = arith.extui %5 : i1 to i32
    %c0_i32_3 = arith.constant 0 : i32
    %7 = arith.cmpi ne, %6, %c0_i32_3 : i32
    scf.if %7 {
      %cst_14 = arith.constant 0.000000e+00 : f32
      %22 = vector.broadcast %cst_14 : f32 to vector<32x1xf32>
      %c0_15 = arith.constant 0 : index
      %c0_16 = arith.constant 0 : index
      %23 = vector.load %arg7[%c0_15, %c0_16] : memref<32x1xf32, #tpu.memory_space<vmem>>, vector<32x1xf32>
      tpu.vector_store %arg7[%c0_15, %c0_16], %22 {strides = array<i32>} : memref<32x1xf32, #tpu.memory_space<vmem>>, vector<32x1xf32>,
    } else {
    }
    %c0 = arith.constant 0 : index
    %c0_4 = arith.constant 0 : index
    %8 = vector.load %arg3[%c0, %c0_4] : memref<32x128xf32, #tpu.memory_space<vmem>>, vector<32x128xf32>
    %c0_5 = arith.constant 0 : index
    %c0_6 = arith.constant 0 : index
    %9 = vector.load %arg4[%c0_5, %c0_6] : memref<32x128xf32, #tpu.memory_space<vmem>>, vector<32x128xf32>
    %10 = arith.subf %8, %9 : vector<32x128xf32>
    %cst = arith.constant 9.99999997E-7 : f32
    %11 = vector.broadcast %cst : f32 to vector<32x128xf32>
    %12 = arith.addf %10, %11 : vector<32x128xf32>
    %c0_7 = arith.constant 0 : index
    %c0_8 = arith.constant 0 : index
    %13 = vector.load %arg7[%c0_7, %c0_8] : memref<32x1xf32, #tpu.memory_space<vmem>>, vector<32x1xf32>
    %14 = arith.mulf %12, %12 : vector<32x128xf32>
    %cst_9 = arith.constant dense<0.000000e+00> : vector<32xf32>
    %15 = vector.multi_reduction <add>, %14, %cst_9 [1] : vector<32x128xf32> to vector<32xf32>
    %16 = vector.shape_cast %15 : vector<32xf32> to vector<32x1xf32>
    %17 = arith.addf %13, %16 : vector<32x1xf32>
    %c0_10 = arith.constant 0 : index
    %c0_11 = arith.constant 0 : index
    %18 = vector.load %arg7[%c0_10, %c0_11] : memref<32x1xf32, #tpu.memory_space<vmem>>, vector<32x1xf32>
    tpu.vector_store %arg7[%c0_10, %c0_11], %17 {strides = array<i32>} : memref<32x1xf32, #tpu.memory_space<vmem>>, vector<32x1xf32>,
    %c0_i32_12 = arith.constant 0 : i32
    %19 = arith.cmpi eq, %arg2, %c0_i32_12 : i32
    %20 = arith.extui %19 : i1 to i32
    %c0_i32_13 = arith.constant 0 : i32
    %21 = arith.cmpi ne, %20, %c0_i32_13 : i32
    scf.if %21 {
      %c0_14 = arith.constant 0 : index
      %c0_15 = arith.constant 0 : index
      %22 = vector.load %arg5[%c0_14, %c0_15] : memref<32x1xf32, #tpu.memory_space<vmem>>, vector<32x1xf32>
      %c0_16 = arith.constant 0 : index
      %c0_17 = arith.constant 0 : index
      %23 = vector.load %arg7[%c0_16, %c0_17] : memref<32x1xf32, #tpu.memory_space<vmem>>, vector<32x1xf32>
      %24 = math.sqrt %23 : vector<32x1xf32>
      %cst_18 = arith.constant 1.000000e+00 : f32
      %25 = vector.broadcast %cst_18 : f32 to vector<32x1xf32>
      %26 = arith.subf %25, %24 : vector<32x1xf32>
      %cst_19 = arith.constant 0.000000e+00 : f32
      %27 = vector.broadcast %cst_19 : f32 to vector<32x1xf32>
      %28 = arith.maximumf %26, %27 : vector<32x1xf32>
      %cst_20 = arith.constant 1.000000e+00 : f32
      %29 = vector.broadcast %cst_20 : f32 to vector<32x1xf32>
      %30 = arith.subf %29, %22 : vector<32x1xf32>
      %31 = arith.mulf %30, %23 : vector<32x1xf32>
      %32 = arith.mulf %28, %28 : vector<32x1xf32>
      %33 = arith.mulf %22, %32 : vector<32x1xf32>
      %34 = arith.addf %31, %33 : vector<32x1xf32>
      %35 = vector.shape_cast %34 : vector<32x1xf32> to vector<1x32x1xf32>
      %cst_21 = arith.constant dense<0.000000e+00> : vector<1xf32>
      %36 = vector.multi_reduction <add>, %35, %cst_21 [1, 2] : vector<1x32x1xf32> to vector<1xf32>
      %37 = vector.shape_cast %36 : vector<1xf32> to vector<1x1x1xf32>
      %38 = vector.extract %37[0, 0, 0] : f32 from vector<1x1x1xf32>
      %39 = vector.broadcast %38 : f32 to vector<1x1xf32>
      %c0_22 = arith.constant 0 : index
      %c0_23 = arith.constant 0 : index
      %c0_24 = arith.constant 0 : index
      %40 = vector.load %arg6[%c0_22, %c0_23, %c0_24] : memref<1x1x1xf32, #tpu.memory_space<vmem>>, vector<1x1x1xf32>
      %41 = vector.shape_cast %39 : vector<1x1xf32> to vector<1x1x1xf32>
      %42 = arith.addf %40, %41 : vector<1x1x1xf32>
      %c0_25 = arith.constant 0 : index
      %c0_26 = arith.constant 0 : index
      %c0_27 = arith.constant 0 : index
      %43 = vector.load %arg6[%c0_25, %c0_26, %c0_27] : memref<1x1x1xf32, #tpu.memory_space<vmem>>, vector<1x1x1xf32>
      tpu.vector_store %arg6[%c0_25, %c0_26, %c0_27], %42 {strides = array<i32>} : memref<1x1x1xf32, #tpu.memory_space<vmem>>, vector<1x1x1xf32>,
    } else {
    }
    return
  }
  func.func @transform_0(%arg0: i32, %arg1: i32, %arg2: i32) -> (i32, i32) {
    %c1_i32 = arith.constant 1 : i32
    %0 = arith.muli %arg0, %c1_i32 : i32
    %1 = arith.addi %0, %arg1 : i32
    %c0_i32 = arith.constant 0 : i32
    %2 = arith.minsi %1, %c0_i32 : i32
    %c0_i32_0 = arith.constant 0 : i32
    return %2, %arg2 : i32, i32
  }
  func.func @transform_1(%arg0: i32, %arg1: i32, %arg2: i32) -> (i32, i32) {
    %c1_i32 = arith.constant 1 : i32
    %0 = arith.muli %arg0, %c1_i32 : i32
    %1 = arith.addi %0, %arg1 : i32
    %c0_i32 = arith.constant 0 : i32
    %2 = arith.minsi %1, %c0_i32 : i32
    %c0_i32_0 = arith.constant 0 : i32
    return %2, %arg2 : i32, i32
  }
  func.func @transform_2(%arg0: i32, %arg1: i32, %arg2: i32) -> (i32, i32) {
    %c1_i32 = arith.constant 1 : i32
    %0 = arith.muli %arg0, %c1_i32 : i32
    %1 = arith.addi %0, %arg1 : i32
    %c0_i32 = arith.constant 0 : i32
    %2 = arith.minsi %1, %c0_i32 : i32
    %c0_i32_0 = arith.constant 0 : i32
    %c0_i32_1 = arith.constant 0 : i32
    return %2, %c0_i32_0 : i32, i32
  }
  func.func @transform_3(%arg0: i32, %arg1: i32, %arg2: i32) -> (i32, i32, i32) {
    %c0_i32 = arith.constant 0 : i32
    %c0_i32_0 = arith.constant 0 : i32
    %c0_i32_1 = arith.constant 0 : i32
    return %arg0, %c0_i32, %c0_i32_0 : i32, i32, i32
  }
}

</mosaic_0001>

<llo_original>
// kernel: tpu_custom_call.1
$region0: #{tpu_custom_call.1}
  #allocation0 [shape = 'u32[]', space=smem, size = 0x4, offset = 0x4, fixed_abs, tag = 'smem constant byte address 0x4 - core index']
  #allocation1 [shape = 'u32[144,128]{1,0:T(1,128)}', space=vmem, size = 0x12000, scoped, tag = 'internal scratch']
  #allocation2 [shape = 'f32[32,1]{1,0:T(8,128)}', space=vmem, size = 0x4000, scoped, tag = 'scratch operand']
  %s0 = inlined_call_operand.vmem [shape: f32[32,128], index: 0, kind: input, shape index: {}]
  %s1 = inlined_call_operand.hbm [shape: f32[32,128], index: 1, kind: input, shape index: {}]
  %s2 = inlined_call_operand.vmem [shape: f32[32,1], index: 2, kind: input, shape index: {}]
  %s3 = inlined_call_operand.hbm [shape: f32[1,1,1], index: 3, kind: output, shape index: {}]
  %s4 = sld [smem:[#allocation0]]
  $region38: #{tpu_custom_call.1} parent=0
    _
  %s6 = ssub.s32 1, %s4
  %s7 = scalar_select 0, %s6, %s4
  $region1: #{tpu_custom_call.1} parent=0
    #allocation3 [shape = 'u8[16384]{0}', space=vmem, size = 0x4000, scoped, tag = 'input window, operand 1, single buffered']
    #allocation4 [shape = 's32[1]{0}', space=sflag, size = 0x4, scoped, tag = 'scoped memory for tpu_custom_call.1']
    #allocation5 [shape = 's32[1]{0}', space=sflag, size = 0x4, scoped, tag = 'scoped memory for tpu_custom_call.1']
    #allocation6 [shape = 'u8[512]{0}', space=vmem, size = 0x400, scoped, tag = 'output window, operand 0, single buffered']
    %8 = vsyncpa [#allocation4], 0
    %9 = vsyncpa [#allocation5], 0
    // Predicated region
    $region2: #{tpu_custom_call.1} parent=1 // pred_check
      _
    $region3: #{tpu_custom_call.1} parent=1 // pred_check_branch
      %11 = sbr.rel (0) target = $region5
    $region4: #{tpu_custom_call.1} parent=1 // pred_region
      %s12 = sadd.s32 0, 0
      %p13 = scmp.lt.s32.totalorder %s12, 0
      %s14 = scalar_select %p13, %s12, 0
      %s15 = smul.u32 4, %s14
      %p16 = scmp.lt.s32.totalorder %s15, 3
      %s17 = scalar_select %p16, %s15, 3
      %s18 = smul.addr %s17, 8
      %s19 = scalar_lea.vmem %s0, %s18
      %s20 = sadd.s32 0, 0
      %p21 = scmp.lt.s32.totalorder %s20, 0
      %s22 = scalar_select %p21, %s20, 0
      %s23 = smul.u32 4, %s22
    $region5: #{tpu_custom_call.1} parent=1 // pred_fallthru
      _
    // Predicated region
    $region6: #{tpu_custom_call.1} parent=1 // pred_check
      _
    $region7: #{tpu_custom_call.1} parent=1 // pred_check_branch
      %25 = sbr.rel (0) target = $region9
    $region8: #{tpu_custom_call.1} parent=1 // pred_region
      %s26 = sadd.s32 0, 0
      %p27 = scmp.lt.s32.totalorder %s26, 0
      %s28 = scalar_select %p27, %s26, 0
      %s29 = smul.u32 4, %s28
      %s31 = ssub.s32 512, 512
      %32 = vsyncadd [#allocation4], %s31
      %s33 = smul.addr %s29, 128
      %s34 = scalar_lea.hbm %s1, %s33
      %s35 = sshll.u32 [#allocation3], 4
      %s36 = int_to_ptr.vmem [resolvable:$true] %s35
      %41 = dma.hbm_to_vmem [thread:$0]  %s34, 512, %s36, [#allocation4], 128, 128, 8
    $region9: #{tpu_custom_call.1} parent=1 // pred_fallthru
      _
    // Predicated region
    $region10: #{tpu_custom_call.1} parent=1 // pred_check
      _
    $region11: #{tpu_custom_call.1} parent=1 // pred_check_branch
      %43 = sbr.rel (0) target = $region13
    $region12: #{tpu_custom_call.1} parent=1 // pred_region
      %s44 = sadd.s32 0, 0
      %p45 = scmp.lt.s32.totalorder %s44, 0
      %s46 = scalar_select %p45, %s44, 0
      %s47 = smul.u32 4, %s46
      %p48 = scmp.lt.s32.totalorder %s47, 3
      %s49 = scalar_select %p48, %s47, 3
      %s50 = smul.addr %s49, 8
      %s51 = scalar_lea.vmem %s2, %s50
      %s52 = sadd.s32 0, 0
      %p53 = scmp.lt.s32.totalorder %s52, 0
      %s54 = scalar_select %p53, %s52, 0
      %s55 = smul.u32 4, %s54
    $region13: #{tpu_custom_call.1} parent=1 // pred_fallthru
      _
    // Predicated region
    $region14: #{tpu_custom_call.1} parent=1 // pred_check
      _
    $region15: #{tpu_custom_call.1} parent=1 // pred_check_branch
      %57 = sbr.rel (0) target = $region17
    $region16: #{tpu_custom_call.1} parent=1 // pred_region
      %58 = dma.done [#allocation4], 512
    $region17: #{tpu_custom_call.1} parent=1 // pred_fallthru
      _
    %s59 = sadd.s32 0, 0
    %p60 = scmp.lt.s32.totalorder %s59, 0
    %s61 = scalar_select %p60, %s59, 0
    %s62 = smul.u32 4, %s61
    %p63 = scmp.lt.s32.totalorder %s62, 3
    %s64 = scalar_select %p63, %s62, 3
    %s65 = smul.addr %s64, 8
    %s66 = scalar_lea.vmem %s0, %s65
    %s67 = sadd.s32 0, 0
    %p68 = scmp.lt.s32.totalorder %s67, 0
    %s69 = scalar_select %p68, %s67, 0
    %s70 = smul.u32 4, %s69
    %p71 = scmp.lt.s32.totalorder %s70, 3
    %s72 = scalar_select %p71, %s70, 3
    %s73 = smul.addr %s72, 8
    %s74 = scalar_lea.vmem %s2, %s73
    %s75 = sadd.s32 0, 0
    %p76 = scmp.lt.s32.totalorder %s75, 0
    %s77 = scalar_select %p76, %s75, 0
    %s78 = smul.u32 4, %s77
    %p79 = scmp.lt.s32.totalorder %s78, 3
    %s80 = scalar_select %p79, %s78, 3
    %s81 = smul.addr %s80, 8
    %s82 = scalar_lea.vmem %s0, %s81
    %s83 = sadd.s32 0, 0
    %p84 = scmp.lt.s32.totalorder %s83, 0
    %s85 = scalar_select %p84, %s83, 0
    %s86 = smul.u32 4, %s85
    %s87 = sadd.s32 0, 0
    %p88 = scmp.lt.s32.totalorder %s87, 0
    %s89 = scalar_select %p88, %s87, 0
    %s90 = smul.u32 4, %s89
    %s91 = sadd.s32 0, 0
    %p92 = scmp.lt.s32.totalorder %s91, 0
    %s93 = scalar_select %p92, %s91, 0
    %s94 = smul.u32 4, %s93
    %p95 = scmp.lt.s32.totalorder %s94, 3
    %s96 = scalar_select %p95, %s94, 3
    %s97 = smul.addr %s96, 8
    %s98 = scalar_lea.vmem %s2, %s97
    %s99 = sadd.s32 0, 0
    %p100 = scmp.lt.s32.totalorder %s99, 0
    %s101 = scalar_select %p100, %s99, 0
    %s102 = smul.u32 4, %s101
    %p103 = scmp.eq.s32.totalorder 0, 0
    %p104 = scmp.eq.s32.totalorder 0, 0
    %p105 = pnand %p103, %p104
    %p106 = pneg %p105
    // Predicated region
    $region18: #{tpu_custom_call.1} parent=1 // pred_check
      _
    $region19: #{tpu_custom_call.1} parent=1 // pred_check_branch
      %108 = sbr.rel (%p105) target = $region21
    $region20: #{tpu_custom_call.1} parent=1 // pred_region
      %vm109 = vcmask 0
      %110 = vst.msk [vmem:[#allocation6] sm:$0x1] %vm109, 0.0
    $region21: #{tpu_custom_call.1} parent=1 // pred_fallthru
      _
    // Predicated region
    $region22: #{tpu_custom_call.1} parent=1 // pred_check
      %p111 = pneg %p104
    $region23: #{tpu_custom_call.1} parent=1 // pred_check_branch
      %113 = sbr.rel (%p111) target = $region25
    $region24: #{tpu_custom_call.1} parent=1 // pred_region
      %vm114 = vcmask 7168
      %115 = vst.msk [vmem:[#allocation2] sm:$0xff] %vm114, 0.0
      %116 = vst.msk [vmem:[#allocation2 + $0x8] sm:$0xff] %vm114, 0.0
      %117 = vst.msk [vmem:[#allocation2 + $0x10] sm:$0xff] %vm114, 0.0
      %118 = vst.msk [vmem:[#allocation2 + $0x18] sm:$0xff] %vm114, 0.0
    $region25: #{tpu_custom_call.1} parent=1 // pred_fallthru
      _
    %v119 = vld [vmem:[%s82] sm:$0xff]
    %v120 = vld [vmem:[%s82 + $0x8] sm:$0xff]
    %v121 = vld [vmem:[%s82 + $0x10] sm:$0xff]
    %v122 = vld [vmem:[%s82 + $0x18] sm:$0xff]
    %v123 = vld [vmem:[#allocation3] sm:$0xff]
    %v124 = vld [vmem:[#allocation3 + $0x8] sm:$0xff]
    %v125 = vld [vmem:[#allocation3 + $0x10] sm:$0xff]
    %v126 = vld [vmem:[#allocation3 + $0x18] sm:$0xff]
    %v127 = vsub.f32 %v119, %v123
    %v128 = vsub.f32 %v120, %v124
    %v129 = vsub.f32 %v121, %v125
    %v130 = vsub.f32 %v122, %v126
    %v131 = vadd.f32 %v127, 1e-06
    %v132 = vadd.f32 %v128, 1e-06
    %v133 = vadd.f32 %v129, 1e-06
    %v134 = vadd.f32 %v130, 1e-06
    %v135 = vld [vmem:[#allocation2] sm:$0xff]
    %v136 = vld [vmem:[#allocation2 + $0x8] sm:$0xff]
    %v137 = vld [vmem:[#allocation2 + $0x10] sm:$0xff]
    %v138 = vld [vmem:[#allocation2 + $0x18] sm:$0xff]
    %v139 = vmul.f32 %v131, %v131
    %v140 = vmul.f32 %v132, %v132
    %v141 = vmul.f32 %v133, %v133
    %v142 = vmul.f32 %v134, %v134
    %143 = vadd.xlane.f32.xlu0 %v139
    %v144 = vpop.xlane.xlu0 %143
    %145 = vadd.xlane.f32.xlu0 %v140
    %v146 = vpop.xlane.xlu0 %145
    %147 = vadd.xlane.f32.xlu0 %v141
    %v148 = vpop.xlane.xlu0 %147
    %149 = vadd.xlane.f32.xlu0 %v142
    %v150 = vpop.xlane.xlu0 %149
    %v151 = vadd.f32 %v135, %v144
    %v152 = vadd.f32 %v136, %v146
    %v153 = vadd.f32 %v137, %v148
    %v154 = vadd.f32 %v138, %v150
    %vm155 = vcmask 7168
    %156 = vst.msk [vmem:[#allocation2] sm:$0xff] %vm155, %v151
    %157 = vst.msk [vmem:[#allocation2 + $0x8] sm:$0xff] %vm155, %v152
    %158 = vst.msk [vmem:[#allocation2 + $0x10] sm:$0xff] %vm155, %v153
    %159 = vst.msk [vmem:[#allocation2 + $0x18] sm:$0xff] %vm155, %v154
    // Predicated region
    $region26: #{tpu_custom_call.1} parent=1 // pred_check
      %p160 = pneg %p104
    $region27: #{tpu_custom_call.1} parent=1 // pred_check_branch
      %162 = sbr.rel (%p160) target = $region29
    $region28: #{tpu_custom_call.1} parent=1 // pred_region
      %v163 = vld [vmem:[%s98] sm:$0xff]
      %v164 = vld [vmem:[%s98 + $0x8] sm:$0xff]
      %v165 = vld [vmem:[%s98 + $0x10] sm:$0xff]
      %v166 = vld [vmem:[%s98 + $0x18] sm:$0xff]
      %v167 = vld [vmem:[#allocation2] sm:$0xff]
      %v168 = vld [vmem:[#allocation2 + $0x8] sm:$0xff]
      %v169 = vld [vmem:[#allocation2 + $0x10] sm:$0xff]
      %v170 = vld [vmem:[#allocation2 + $0x18] sm:$0xff]
      %v171 = vrsqrt.pop %v167
      %v172 = vmul.f32 %v167, %v171
      %vm173 = vcmp.eq.f32.partialorder %v167, inf
      %v174 = vsel %vm173, %v167, %v172
      %vm175 = vcmp.eq.f32.partialorder %v167, 0.0
      %v176 = vand.u32 %v167, 2147483648
      %v177 = vsel %vm175, %v176, %v174
      %v178 = vrsqrt.pop %v168
      %v179 = vmul.f32 %v168, %v178
      %vm180 = vcmp.eq.f32.partialorder %v168, inf
      %v181 = vsel %vm180, %v168, %v179
      %vm182 = vcmp.eq.f32.partialorder %v168, 0.0
      %v183 = vand.u32 %v168, 2147483648
      %v184 = vsel %vm182, %v183, %v181
      %v185 = vrsqrt.pop %v169
      %v186 = vmul.f32 %v169, %v185
      %vm187 = vcmp.eq.f32.partialorder %v169, inf
      %v188 = vsel %vm187, %v169, %v186
      %vm189 = vcmp.eq.f32.partialorder %v169, 0.0
      %v190 = vand.u32 %v169, 2147483648
      %v191 = vsel %vm189, %v190, %v188
      %v192 = vrsqrt.pop %v170
      %v193 = vmul.f32 %v170, %v192
      %vm194 = vcmp.eq.f32.partialorder %v170, inf
      %v195 = vsel %vm194, %v170, %v193
      %vm196 = vcmp.eq.f32.partialorder %v170, 0.0
      %v197 = vand.u32 %v170, 2147483648
      %v198 = vsel %vm196, %v197, %v195
      %v199 = vsub.f32 1.0, %v177
      %v200 = vsub.f32 1.0, %v184
      %v201 = vsub.f32 1.0, %v191
      %v202 = vsub.f32 1.0, %v198
      %v203 = vmax.f32 %v199, 0.0
      %v204 = vmax.f32 %v200, 0.0
      %v205 = vmax.f32 %v201, 0.0
      %v206 = vmax.f32 %v202, 0.0
      %v207 = vsub.f32 1.0, %v163
      %v208 = vsub.f32 1.0, %v164
      %v209 = vsub.f32 1.0, %v165
      %v210 = vsub.f32 1.0, %v166
      %v211 = vmul.f32 %v207, %v167
      %v212 = vmul.f32 %v208, %v168
      %v213 = vmul.f32 %v209, %v169
      %v214 = vmul.f32 %v210, %v170
      %v215 = vmul.f32 %v203, %v203
      %v216 = vmul.f32 %v204, %v204
      %v217 = vmul.f32 %v205, %v205
      %v218 = vmul.f32 %v206, %v206
      %v219 = vmul.f32 %v163, %v215
      %v220 = vmul.f32 %v164, %v216
      %v221 = vmul.f32 %v165, %v217
      %v222 = vmul.f32 %v166, %v218
      %v223 = vadd.f32 %v211, %v219
      %v224 = vadd.f32 %v212, %v220
      %v225 = vadd.f32 %v213, %v221
      %v226 = vadd.f32 %v214, %v222
      %v227 = vsel %vm155, %v223, 0.0
      %v228 = vsel %vm155, %v224, 0.0
      %v229 = vadd.f32 %v227, %v228
      %v230 = vsel %vm155, %v225, 0.0
      %v231 = vadd.f32 %v229, %v230
      %v232 = vsel %vm155, %v226, 0.0
      %v233 = vadd.f32 %v231, %v232
      %234 = vadd.xlane.f32.xlu0 %v233
      %v235 = vpop.xlane.xlu0 %234
      %v236 = vrot.slane %v235, 4
      %v237 = vadd.f32 %v235, %v236
      %v238 = vrot.slane %v237, 2
      %v239 = vadd.f32 %v237, %v238
      %v240 = vrot.slane %v239, 1
      %v241 = vadd.f32 %v239, %v240
      %s242 = vtos %v241
      %v243 = vld [vmem:[#allocation6] sm:$0x1]
      %v244 = vstv %s242
      %v245 = vadd.f32 %v243, %v244
      %vm246 = vcmask 0
      %247 = vst.msk [vmem:[#allocation6] sm:$0x1] %vm246, %v245
    $region29: #{tpu_custom_call.1} parent=1 // pred_fallthru
      _
    // Predicated region
    $region30: #{tpu_custom_call.1} parent=1 // pred_check
      _
    $region31: #{tpu_custom_call.1} parent=1 // pred_check_branch
      %249 = sbr.rel (0) target = $region33
    $region32: #{tpu_custom_call.1} parent=1 // pred_region
      %s251 = ssub.s32 16, 16
      %252 = vsyncadd [#allocation5], %s251
      %s254 = sshll.u32 [#allocation6], 4
      %s255 = int_to_ptr.vmem [resolvable:$true] %s254
      %257 = dma.vmem_to_hbm [thread:$0]  %s255, 16, %s3, [#allocation5]
    $region33: #{tpu_custom_call.1} parent=1 // pred_fallthru
      _
    // Predicated region
    $region34: #{tpu_custom_call.1} parent=1 // pred_check
      _
    $region35: #{tpu_custom_call.1} parent=1 // pred_check_branch
      %259 = sbr.rel (0) target = $region37
    $region36: #{tpu_custom_call.1} parent=1 // pred_region
      %260 = dma.done [#allocation5], 16
    $region37: #{tpu_custom_call.1} parent=1 // pred_fallthru
      _
    %261 = vsyncpa [#allocation4], 1
    %262 = vsyncpa [#allocation5], 1

</llo_original>
